<compile_context>
chip_gen: v7x
topology: tpu7x:2x2x1
jax: 0.10.0
libtpu: 0.0.40
codegen_flags: <defaults>
</compile_context>

<pallas_src>
import functools

import jax
import jax.numpy as jnp
from jax.experimental import pallas as pl
from jax.experimental.pallas import tpu as pltpu


def _attention_gate_kernel(
    g_ref,    # (1, Cg, tp)  gate pixels (pixels on lanes)
    x_ref,    # (1, Cf, tp)  skip-connection pixels
    wg_ref,   # (Ci, Cg)     gate 1x1 conv weight, BN scale folded, transposed
    wx_ref,   # (Ci, Cf)     feat 1x1 conv weight, BN scale folded, transposed
    wa_ref,   # (1, Ci)      alpha 1x1 conv weight, transposed
    b_ref,    # (Ci, 1)      combined gate-BN + feat-BN (+ feat bias) shift
    ba_ref,   # (1,) SMEM    alpha conv bias (scalar)
    out_ref,  # (1, 1, tp)   attention coefficients (lane-dense)
):
    g = g_ref[0].astype(jnp.float32)   # (Cg, tp)
    x = x_ref[0].astype(jnp.float32)   # (Cf, tp)

    # gate path + feat path: 1x1 convs with BN scales pre-folded into weights.
    gi = jnp.dot(wg_ref[...], g, preferred_element_type=jnp.float32)   # (Ci, tp)
    xi = jnp.dot(wx_ref[...], x, preferred_element_type=jnp.float32)   # (Ci, tp)

    # add paths + combined BN shifts, relu, 1x1 conv to one channel, sigmoid.
    z = jnp.maximum(gi + xi + b_ref[...], 0.0)                          # (Ci, tp)
    a = jnp.dot(wa_ref[...], z, preferred_element_type=jnp.float32) + ba_ref[0]
    out_ref[0] = jax.nn.sigmoid(a).astype(out_ref.dtype)                # (1, tp)


@functools.partial(jax.jit, static_argnames=("tp",))
def attention_gate(g_nchw, x_nchw, params, tp=2048):
    """g_nchw: (N, Cg, H, W), x_nchw: (N, Cf, H, W) -> alpha: (N, 1, H, W)."""
    N, Cg, H, W = g_nchw.shape
    _, Cf, _, _ = x_nchw.shape
    Ci = params["wg"].shape[1]
    HW = H * W

    # NCHW -> (N, C, H*W): pure reshape, no data movement / transpose pass.
    g_mat = g_nchw.reshape(N, Cg, HW)
    x_mat = x_nchw.reshape(N, Cf, HW)

    eps = 1e-5
    # Fold eval-mode BatchNorm into per-channel scale/shift ...
    sg = params["bn_g_gamma"] * jax.lax.rsqrt(params["bn_g_var"] + eps)
    bg = params["bn_g_beta"] - sg * params["bn_g_mean"]
    sx = params["bn_x_gamma"] * jax.lax.rsqrt(params["bn_x_var"] + eps)
    bx = params["bn_x_beta"] + sx * (params["feat_bias"] - params["bn_x_mean"])

    # ... then fold the scales into the conv weights and transpose to
    # (C_out, C_in) so the kernel computes (Ci, C) @ (C, tp).
    wg_f = (params["wg"] * sg[None, :]).T.astype(jnp.float32)    # (Ci, Cg)
    wx_f = (params["wx"] * sx[None, :]).T.astype(jnp.float32)    # (Ci, Cf)
    wa_t = params["wa"].T.astype(jnp.float32)                    # (1, Ci)
    b = (bg + bx).reshape(Ci, 1).astype(jnp.float32)             # (Ci, 1) combined shift
    ba = params["alpha_bias"].reshape(1).astype(jnp.float32)     # scalar bias via SMEM

    # Pixel tile: big (2K+ pixels) lane-dense tiles; full-extent if HW is small.
    if HW <= tp:
        tp_eff = HW
    else:
        tp_eff = max(128, (tp // 128) * 128)
    grid = (N, pl.cdiv(HW, tp_eff))

    const_spec = lambda shape: pl.BlockSpec(shape, lambda n, p: (0, 0))

    alpha_flat = pl.pallas_call(
        _attention_gate_kernel,
        out_shape=jax.ShapeDtypeStruct((N, 1, HW), jnp.float32),
        grid=grid,
        in_specs=[
            pl.BlockSpec((1, Cg, tp_eff), lambda n, p: (n, 0, p)),
            pl.BlockSpec((1, Cf, tp_eff), lambda n, p: (n, 0, p)),
            const_spec((Ci, Cg)),
            const_spec((Ci, Cf)),
            const_spec((1, Ci)),
            const_spec((Ci, 1)),
            pl.BlockSpec(memory_space=pltpu.MemorySpace.SMEM),
        ],
        out_specs=pl.BlockSpec((1, 1, tp_eff), lambda n, p: (n, 0, p)),
        compiler_params=pltpu.CompilerParams(
            dimension_semantics=("parallel", "parallel")),
    )(g_mat, x_mat, wg_f, wx_f, wa_t, b, ba)

    # (N, 1, H*W) -> (N, 1, H, W): pure reshape.
    return alpha_flat.reshape(N, 1, H, W)


def _reference(g_nchw, x_nchw, params):
    """Pure-JAX reference mirroring the PyTorch forward (eval-mode BN)."""
    eps = 1e-5
    g = jnp.einsum("nchw,cd->ndhw", g_nchw, params["wg"])
    g = (g - params["bn_g_mean"][None, :, None, None]) / jnp.sqrt(
        params["bn_g_var"][None, :, None, None] + eps)
    g = g * params["bn_g_gamma"][None, :, None, None] + params["bn_g_beta"][None, :, None, None]
    x = jnp.einsum("nchw,cd->ndhw", x_nchw, params["wx"]) + params["feat_bias"][None, :, None, None]
    x = (x - params["bn_x_mean"][None, :, None, None]) / jnp.sqrt(
        params["bn_x_var"][None, :, None, None] + eps)
    x = x * params["bn_x_gamma"][None, :, None, None] + params["bn_x_beta"][None, :, None, None]
    z = jax.nn.relu(g + x)
    a = jnp.einsum("ndhw,do->nohw", z, params["wa"]) + params["alpha_bias"][None, :, None, None]
    return jax.nn.sigmoid(a)


def _init_params(key, gate_channels, feat_channels, int_channels):
    ks = jax.random.split(key, 8)
    return {
        # 1x1 conv weights stored as (C_in, C_out) for channel matmul
        "wg": 0.1 * jax.random.normal(ks[0], (gate_channels, int_channels), jnp.float32),
        "wx": 0.1 * jax.random.normal(ks[1], (feat_channels, int_channels), jnp.float32),
        "wa": 0.1 * jax.random.normal(ks[2], (int_channels, 1), jnp.float32),
        "feat_bias": 0.05 * jax.random.normal(ks[3], (int_channels,), jnp.float32),
        "alpha_bias": 0.05 * jax.random.normal(ks[4], (1,), jnp.float32),
        # BatchNorm (eval-mode) params / running stats, non-trivial values
        "bn_g_gamma": 1.0 + 0.1 * jax.random.normal(ks[5], (int_channels,), jnp.float32),
        "bn_g_beta": 0.1 * jnp.arange(int_channels, dtype=jnp.float32) / int_channels,
        "bn_g_mean": 0.02 * jnp.arange(int_channels, dtype=jnp.float32),
        "bn_g_var": 1.0 + 0.05 * jnp.arange(int_channels, dtype=jnp.float32),
        "bn_x_gamma": 1.0 + 0.1 * jax.random.normal(ks[6], (int_channels,), jnp.float32),
        "bn_x_beta": -0.1 * jnp.arange(int_channels, dtype=jnp.float32) / int_channels,
        "bn_x_mean": -0.01 * jnp.arange(int_channels, dtype=jnp.float32),
        "bn_x_var": 1.0 + 0.03 * jnp.arange(int_channels, dtype=jnp.float32),
    }


if __name__ == "__main__":
    N, H, W = 2, 16, 16
    gate_channels, feat_channels, int_channels = 6, 4, 8

    key = jax.random.PRNGKey(0)
    kg, kx, kp = jax.random.split(key, 3)
    g = jax.random.normal(kg, (N, gate_channels, H, W), jnp.float32)
    x = jax.random.normal(kx, (N, feat_channels, H, W), jnp.float32)
    params = _init_params(kp, gate_channels, feat_channels, int_channels)

    alpha = attention_gate(g, x, params)
    alpha = jax.block_until_ready(alpha)

    ref = _reference(g, x, params)
    assert alpha.shape == (N, 1, H, W), alpha.shape
    assert jnp.allclose(alpha, ref, atol=1e-5, rtol=1e-5), (
        float(jnp.max(jnp.abs(alpha - ref)))
    )
    print("KERNEL_OK")
</pallas_src>

<mosaic_0001>
module attributes {stable_mosaic.version = 11 : i64} {
  func.func @_attention_gate_kernel(%arg0: i32, %arg1: i32, %arg2: memref<1x6x256xf32, #tpu.memory_space<vmem>>, %arg3: memref<1x4x256xf32, #tpu.memory_space<vmem>>, %arg4: memref<8x6xf32, #tpu.memory_space<vmem>>, %arg5: memref<8x4xf32, #tpu.memory_space<vmem>>, %arg6: memref<1x8xf32, #tpu.memory_space<vmem>>, %arg7: memref<8x1xf32, #tpu.memory_space<vmem>>, %arg8: memref<1xf32, #tpu.memory_space<smem>>, %arg9: memref<1x1x256xf32, #tpu.memory_space<vmem>>) attributes {dimension_semantics = [#tpu.dimension_semantics<parallel>, #tpu.dimension_semantics<parallel>], iteration_bounds = array<i64: 2, 1>, scalar_prefetch = 0 : i64, scratch_operands = 0 : i64, tpu.core_type = #tpu.core_type<tc>, window_params = [{transform_indices = @transform_0, window_bounds = array<i64: 1, 6, 256>}, {transform_indices = @transform_1, window_bounds = array<i64: 1, 4, 256>}, {pipeline_mode = #tpu.pipeline_mode<synchronous>, transform_indices = @transform_2, window_bounds = array<i64: 8, 6>}, {pipeline_mode = #tpu.pipeline_mode<synchronous>, transform_indices = @transform_3, window_bounds = array<i64: 8, 4>}, {pipeline_mode = #tpu.pipeline_mode<synchronous>, transform_indices = @transform_4, window_bounds = array<i64: 1, 8>}, {pipeline_mode = #tpu.pipeline_mode<synchronous>, transform_indices = @transform_5, window_bounds = array<i64: 8, 1>}, {transform_indices = @transform_6, window_bounds = array<i64: 1>}, {transform_indices = @transform_7, window_bounds = array<i64: 1, 1, 256>}]} {
    %c0 = arith.constant 0 : index
    %c0_0 = arith.constant 0 : index
    %c0_1 = arith.constant 0 : index
    %0 = vector.load %arg2[%c0, %c0_0, %c0_1] : memref<1x6x256xf32, #tpu.memory_space<vmem>>, vector<1x6x256xf32>
    %1 = vector.shape_cast %0 : vector<1x6x256xf32> to vector<6x256xf32>
    %c0_2 = arith.constant 0 : index
    %c0_3 = arith.constant 0 : index
    %c0_4 = arith.constant 0 : index
    %2 = vector.load %arg3[%c0_2, %c0_3, %c0_4] : memref<1x4x256xf32, #tpu.memory_space<vmem>>, vector<1x4x256xf32>
    %3 = vector.shape_cast %2 : vector<1x4x256xf32> to vector<4x256xf32>
    %c0_5 = arith.constant 0 : index
    %c0_6 = arith.constant 0 : index
    %4 = vector.load %arg4[%c0_5, %c0_6] : memref<8x6xf32, #tpu.memory_space<vmem>>, vector<8x6xf32>
    %cst = arith.constant dense<0.000000e+00> : vector<8x256xf32>
    %5 = tpu.matmul %4, %1, %cst {dimension_numbers = #tpu.dot_dimension_numbers<[1], [0], [0], [1], [0, 0, 1, 1], [], []>} : vector<8x6xf32>, vector<6x256xf32>, vector<8x256xf32> -> vector<8x256xf32>
    %c0_7 = arith.constant 0 : index
    %c0_8 = arith.constant 0 : index
    %6 = vector.load %arg5[%c0_7, %c0_8] : memref<8x4xf32, #tpu.memory_space<vmem>>, vector<8x4xf32>
    %cst_9 = arith.constant dense<0.000000e+00> : vector<8x256xf32>
    %7 = tpu.matmul %6, %3, %cst_9 {dimension_numbers = #tpu.dot_dimension_numbers<[1], [0], [0], [1], [0, 0, 1, 1], [], []>} : vector<8x4xf32>, vector<4x256xf32>, vector<8x256xf32> -> vector<8x256xf32>
    %8 = arith.addf %5, %7 : vector<8x256xf32>
    %c0_10 = arith.constant 0 : index
    %c0_11 = arith.constant 0 : index
    %9 = vector.load %arg7[%c0_10, %c0_11] : memref<8x1xf32, #tpu.memory_space<vmem>>, vector<8x1xf32>
    %10 = vector.broadcast %9 : vector<8x1xf32> to vector<8x256xf32>
    %11 = arith.addf %8, %10 : vector<8x256xf32>
    %cst_12 = arith.constant 0.000000e+00 : f32
    %12 = vector.broadcast %cst_12 : f32 to vector<8x256xf32>
    %13 = arith.maximumf %11, %12 : vector<8x256xf32>
    %c0_13 = arith.constant 0 : index
    %c0_14 = arith.constant 0 : index
    %14 = vector.load %arg6[%c0_13, %c0_14] : memref<1x8xf32, #tpu.memory_space<vmem>>, vector<1x8xf32>
    %cst_15 = arith.constant dense<0.000000e+00> : vector<1x256xf32>
    %15 = tpu.matmul %14, %13, %cst_15 {dimension_numbers = #tpu.dot_dimension_numbers<[1], [0], [0], [1], [0, 0, 1, 1], [], []>} : vector<1x8xf32>, vector<8x256xf32>, vector<1x256xf32> -> vector<1x256xf32>
    %c0_16 = arith.constant 0 : index
    %16 = memref.load %arg8[%c0_16] : memref<1xf32, #tpu.memory_space<smem>>
    %17 = vector.broadcast %16 : f32 to vector<1x256xf32>
    %18 = arith.addf %15, %17 : vector<1x256xf32>
    %19 = arith.negf %18 : vector<1x256xf32>
    %20 = math.exp %19 : vector<1x256xf32>
    %cst_17 = arith.constant 1.000000e+00 : f32
    %21 = vector.broadcast %cst_17 : f32 to vector<1x256xf32>
    %22 = arith.addf %21, %20 : vector<1x256xf32>
    %23 = arith.divf %21, %22 : vector<1x256xf32>
    %c0_18 = arith.constant 0 : index
    %c0_19 = arith.constant 0 : index
    %c0_20 = arith.constant 0 : index
    %24 = vector.load %arg9[%c0_18, %c0_19, %c0_20] : memref<1x1x256xf32, #tpu.memory_space<vmem>>, vector<1x1x256xf32>
    %25 = vector.shape_cast %24 : vector<1x1x256xf32> to vector<1x256xf32>
    %26 = vector.shape_cast %23 : vector<1x256xf32> to vector<1x1x256xf32>
    tpu.vector_store %arg9[%c0_18, %c0_19, %c0_20], %26 {strides = array<i32>} : memref<1x1x256xf32, #tpu.memory_space<vmem>>, vector<1x1x256xf32>,
    return
  }
  func.func @transform_0(%arg0: i32, %arg1: i32) -> (i32, i32, i32) {
    %c0_i32 = arith.constant 0 : i32
    %c0_i32_0 = arith.constant 0 : i32
    return %arg0, %c0_i32, %arg1 : i32, i32, i32
  }
  func.func @transform_1(%arg0: i32, %arg1: i32) -> (i32, i32, i32) {
    %c0_i32 = arith.constant 0 : i32
    %c0_i32_0 = arith.constant 0 : i32
    return %arg0, %c0_i32, %arg1 : i32, i32, i32
  }
  func.func @transform_2(%arg0: i32, %arg1: i32) -> (i32, i32) {
    %c0_i32 = arith.constant 0 : i32
    %c0_i32_0 = arith.constant 0 : i32
    %c0_i32_1 = arith.constant 0 : i32
    return %c0_i32, %c0_i32_0 : i32, i32
  }
  func.func @transform_3(%arg0: i32, %arg1: i32) -> (i32, i32) {
    %c0_i32 = arith.constant 0 : i32
    %c0_i32_0 = arith.constant 0 : i32
    %c0_i32_1 = arith.constant 0 : i32
    return %c0_i32, %c0_i32_0 : i32, i32
  }
  func.func @transform_4(%arg0: i32, %arg1: i32) -> (i32, i32) {
    %c0_i32 = arith.constant 0 : i32
    %c0_i32_0 = arith.constant 0 : i32
    %c0_i32_1 = arith.constant 0 : i32
    return %c0_i32, %c0_i32_0 : i32, i32
  }
  func.func @transform_5(%arg0: i32, %arg1: i32) -> (i32, i32) {
    %c0_i32 = arith.constant 0 : i32
    %c0_i32_0 = arith.constant 0 : i32
    %c0_i32_1 = arith.constant 0 : i32
    return %c0_i32, %c0_i32_0 : i32, i32
  }
  func.func @transform_6(%arg0: i32, %arg1: i32) -> i32 {
    %c0_i32 = arith.constant 0 : i32
    %c0_i32_0 = arith.constant 0 : i32
    return %c0_i32 : i32
  }
  func.func @transform_7(%arg0: i32, %arg1: i32) -> (i32, i32, i32) {
    %c0_i32 = arith.constant 0 : i32
    %c0_i32_0 = arith.constant 0 : i32
    return %arg0, %c0_i32, %arg1 : i32, i32, i32
  }
}

</mosaic_0001>

<llo_original>
// kernel: attention_gate.1
$region0: #{attention_gate.1}
  #allocation0 [shape = 'u32[]', space=smem, size = 0x4, offset = 0x4, fixed_abs, tag = 'smem constant byte address 0x4 - core index']
  #allocation1 [shape = 'u32[144,128]{1,0:T(1,128)}', space=vmem, size = 0x12000, scoped, tag = 'internal scratch']
  #allocation2 [shape = 'f32[1]{0:T(128)S(6)}', space=smem, size = 0x200, scoped, tag = 'scoped memory for attention_gate.1']
  %s0 = inlined_call_operand.vmem [shape: f32[2,6,256], index: 0, kind: input, shape index: {}]
  %s1 = inlined_call_operand.vmem [shape: f32[2,4,256], index: 1, kind: input, shape index: {}]
  %s2 = inlined_call_operand.vmem [shape: f32[8,6], index: 2, kind: input, shape index: {}]
  %s3 = inlined_call_operand.vmem [shape: f32[8,4], index: 3, kind: input, shape index: {}]
  %s4 = inlined_call_operand.vmem [shape: f32[1,8], index: 4, kind: input, shape index: {}]
  %s5 = inlined_call_operand.vmem [shape: f32[8,1], index: 5, kind: input, shape index: {}]
  %s6 = inlined_call_operand.<no memory space> [shape: f32[1], index: 6, kind: input, shape index: {}]
  %s7 = inlined_call_operand.vmem [shape: f32[2,1,256], index: 7, kind: output, shape index: {}]
  %s8 = sld [smem:[#allocation0]]
  $region61: #{attention_gate.1} parent=0
    _
  %s10 = ssub.s32 1, %s8
  %s11 = scalar_select 0, %s10, %s8
  %12 = sst [smem:[#allocation2]] %s6
  loop: start=0, step=1, limit=4
  $region2: #{attention_gate.1} parent=0 // loop_pre_header
    _
  $region3: #{attention_gate.1} parent=0 // loop_header
    %s14 = sphi 0, %s18
    %p15 = scmp.ge.s32.totalorder %s14, 4
    %s21 = sphi 0, %s33
    %s22 = sphi 0, %s29
    %s23 = sphi 0, %s21
    %s24 = sphi 0, %s22
    %s25 = sphi 0, %s23
    %s26 = sphi 0, %s24
    %s38 = sphi 0, %s40
    %s41 = sphi 0, %s38
    %s42 = sphi 0, %s41
    %s58 = sphi 0, %s42
    %s66 = sphi 0, %s68
    %s69 = sphi 0, %s66
    %s70 = sphi 0, %s69
    %s86 = sphi 0, %s70
    %s90 = sphi 0, %s90
    %s92 = sphi 0, %s90
    %s93 = sphi 0, %s92
    %s107 = sphi 0, %s93
    %s111 = sphi 0, %s111
    %s113 = sphi 0, %s111
    %s114 = sphi 0, %s113
    %s128 = sphi 0, %s114
    %s132 = sphi 0, %s132
    %s134 = sphi 0, %s132
    %s135 = sphi 0, %s134
    %s149 = sphi 0, %s135
    %s153 = sphi 0, %s153
    %s155 = sphi 0, %s153
    %s156 = sphi 0, %s155
    %s170 = sphi 0, %s156
    %s174 = sphi 0, %s174
    %s176 = sphi 0, %s174
    %s177 = sphi 0, %s176
    %s191 = sphi 0, %s177
    %s199 = sphi 0, %s201
    %s202 = sphi 0, %s199
    %s203 = sphi 0, %s202
    %s219 = sphi 0, %s203
  $region4: #{attention_gate.1} parent=0 // loop_header_branch
    %17 = sbr.rel (%p15) target = $region8
  $region5: #{attention_gate.1} parent=0 // loop_body
    %s19 = ssub.s32 %s14, 1
    %s20 = ssub.s32 %s14, 2
    %s27 = sadd.s32 1, %s22
    %p28 = scmp.ge.s32.totalorder %s27, 1
    %s29 = scalar_select %p28, 0, %s27
    %s30 = sadd.s32 1, %s21
    %s31 = scalar_select %p28, %s30, %s21
    %p32 = scmp.ge.s32.totalorder %s31, 2
    %s33 = scalar_select %p32, 0, %s31
    %s34 = ssub.s32 %s21, %s33
    %s35 = ssub.s32 %s22, %s29
    %s36 = sor.u32 %s34, %s35
    %p37 = scmp.eq.s32.totalorder %s36, 0
    %s39 = sadd.s32 %s38, 1
    %s40 = scalar_select %p37, %s38, %s39
    %p43 = pneg %p37
    %p44 = scmp.eq.s32.totalorder %s14, 1
    %p45 = por %p43, %p44
    %p46 = scmp.ne.s32.totalorder %s38, %s41
    %p47 = scmp.eq.s32.totalorder %s14, 0
    %p48 = por %p46, %p47
    %p49 = scmp.ne.s32.totalorder %s38, %s41
    %p50 = scmp.eq.s32.totalorder %s19, 1
    %p51 = por %p49, %p50
    %p52 = scmp.ne.s32.totalorder %s41, %s42
    %p53 = scmp.eq.s32.totalorder %s19, 0
    %p54 = por %p52, %p53
    %p55 = scmp.ne.s32.totalorder %s41, %s42
    %p56 = scmp.eq.s32.totalorder %s20, 1
    %p57 = por %p55, %p56
    %p59 = scmp.ne.s32.totalorder %s42, %s58
    %p60 = scmp.eq.s32.totalorder %s20, 0
    %p61 = por %p59, %p60
    %s62 = ssub.s32 %s21, %s33
    %s63 = ssub.s32 %s22, %s29
    %s64 = sor.u32 %s62, %s63
    %p65 = scmp.eq.s32.totalorder %s64, 0
    %s67 = sadd.s32 %s66, 1
    %s68 = scalar_select %p65, %s66, %s67
    %p71 = pneg %p65
    %p72 = scmp.eq.s32.totalorder %s14, 1
    %p73 = por %p71, %p72
    %p74 = scmp.ne.s32.totalorder %s66, %s69
    %p75 = scmp.eq.s32.totalorder %s14, 0
    %p76 = por %p74, %p75
    %p77 = scmp.ne.s32.totalorder %s66, %s69
    %p78 = scmp.eq.s32.totalorder %s19, 1
    %p79 = por %p77, %p78
    %p80 = scmp.ne.s32.totalorder %s69, %s70
    %p81 = scmp.eq.s32.totalorder %s19, 0
    %p82 = por %p80, %p81
    %p83 = scmp.ne.s32.totalorder %s69, %s70
    %p84 = scmp.eq.s32.totalorder %s20, 1
    %p85 = por %p83, %p84
    %p87 = scmp.ne.s32.totalorder %s70, %s86
    %p88 = scmp.eq.s32.totalorder %s20, 0
    %p89 = por %p87, %p88
    %s91 = sadd.s32 %s90, 1
    %p94 = scmp.eq.s32.totalorder %s14, 1
    %p95 = scmp.ne.s32.totalorder %s90, %s92
    %p96 = scmp.eq.s32.totalorder %s14, 0
    %p97 = por %p95, %p96
    %p98 = scmp.ne.s32.totalorder %s90, %s92
    %p99 = scmp.eq.s32.totalorder %s19, 1
    %p100 = por %p98, %p99
    %p101 = scmp.ne.s32.totalorder %s92, %s93
    %p102 = scmp.eq.s32.totalorder %s19, 0
    %p103 = por %p101, %p102
    %p104 = scmp.ne.s32.totalorder %s92, %s93
    %p105 = scmp.eq.s32.totalorder %s20, 1
    %p106 = por %p104, %p105
    %p108 = scmp.ne.s32.totalorder %s93, %s107
    %p109 = scmp.eq.s32.totalorder %s20, 0
    %p110 = por %p108, %p109
    %s112 = sadd.s32 %s111, 1
    %p115 = scmp.eq.s32.totalorder %s14, 1
    %p116 = scmp.ne.s32.totalorder %s111, %s113
    %p117 = scmp.eq.s32.totalorder %s14, 0
    %p118 = por %p116, %p117
    %p119 = scmp.ne.s32.totalorder %s111, %s113
    %p120 = scmp.eq.s32.totalorder %s19, 1
    %p121 = por %p119, %p120
    %p122 = scmp.ne.s32.totalorder %s113, %s114
    %p123 = scmp.eq.s32.totalorder %s19, 0
    %p124 = por %p122, %p123
    %p125 = scmp.ne.s32.totalorder %s113, %s114
    %p126 = scmp.eq.s32.totalorder %s20, 1
    %p127 = por %p125, %p126
    %p129 = scmp.ne.s32.totalorder %s114, %s128
    %p130 = scmp.eq.s32.totalorder %s20, 0
    %p131 = por %p129, %p130
    %s133 = sadd.s32 %s132, 1
    %p136 = scmp.eq.s32.totalorder %s14, 1
    %p137 = scmp.ne.s32.totalorder %s132, %s134
    %p138 = scmp.eq.s32.totalorder %s14, 0
    %p139 = por %p137, %p138
    %p140 = scmp.ne.s32.totalorder %s132, %s134
    %p141 = scmp.eq.s32.totalorder %s19, 1
    %p142 = por %p140, %p141
    %p143 = scmp.ne.s32.totalorder %s134, %s135
    %p144 = scmp.eq.s32.totalorder %s19, 0
    %p145 = por %p143, %p144
    %p146 = scmp.ne.s32.totalorder %s134, %s135
    %p147 = scmp.eq.s32.totalorder %s20, 1
    %p148 = por %p146, %p147
    %p150 = scmp.ne.s32.totalorder %s135, %s149
    %p151 = scmp.eq.s32.totalorder %s20, 0
    %p152 = por %p150, %p151
    %s154 = sadd.s32 %s153, 1
    %p157 = scmp.eq.s32.totalorder %s14, 1
    %p158 = scmp.ne.s32.totalorder %s153, %s155
    %p159 = scmp.eq.s32.totalorder %s14, 0
    %p160 = por %p158, %p159
    %p161 = scmp.ne.s32.totalorder %s153, %s155
    %p162 = scmp.eq.s32.totalorder %s19, 1
    %p163 = por %p161, %p162
    %p164 = scmp.ne.s32.totalorder %s155, %s156
    %p165 = scmp.eq.s32.totalorder %s19, 0
    %p166 = por %p164, %p165
    %p167 = scmp.ne.s32.totalorder %s155, %s156
    %p168 = scmp.eq.s32.totalorder %s20, 1
    %p169 = por %p167, %p168
    %p171 = scmp.ne.s32.totalorder %s156, %s170
    %p172 = scmp.eq.s32.totalorder %s20, 0
    %p173 = por %p171, %p172
    %s175 = sadd.s32 %s174, 1
    %p178 = scmp.eq.s32.totalorder %s14, 1
    %p179 = scmp.ne.s32.totalorder %s174, %s176
    %p180 = scmp.eq.s32.totalorder %s14, 0
    %p181 = por %p179, %p180
    %p182 = scmp.ne.s32.totalorder %s174, %s176
    %p183 = scmp.eq.s32.totalorder %s19, 1
    %p184 = por %p182, %p183
    %p185 = scmp.ne.s32.totalorder %s176, %s177
    %p186 = scmp.eq.s32.totalorder %s19, 0
    %p187 = por %p185, %p186
    %p188 = scmp.ne.s32.totalorder %s176, %s177
    %p189 = scmp.eq.s32.totalorder %s20, 1
    %p190 = por %p188, %p189
    %p192 = scmp.ne.s32.totalorder %s177, %s191
    %p193 = scmp.eq.s32.totalorder %s20, 0
    %p194 = por %p192, %p193
    %s195 = ssub.s32 %s21, %s33
    %s196 = ssub.s32 %s22, %s29
    %s197 = sor.u32 %s195, %s196
    %p198 = scmp.eq.s32.totalorder %s197, 0
    %s200 = sadd.s32 %s199, 1
    %s201 = scalar_select %p198, %s199, %s200
    %p204 = pneg %p198
    %p205 = scmp.eq.s32.totalorder %s14, 1
    %p206 = por %p204, %p205
    %p207 = scmp.ne.s32.totalorder %s199, %s202
    %p208 = scmp.eq.s32.totalorder %s14, 0
    %p209 = por %p207, %p208
    %p210 = scmp.ne.s32.totalorder %s199, %s202
    %p211 = scmp.eq.s32.totalorder %s19, 1
    %p212 = por %p210, %p211
    %p213 = scmp.ne.s32.totalorder %s202, %s203
    %p214 = scmp.eq.s32.totalorder %s19, 0
    %p215 = por %p213, %p214
    %p216 = scmp.ne.s32.totalorder %s202, %s203
    %p217 = scmp.eq.s32.totalorder %s20, 1
    %p218 = por %p216, %p217
    %p220 = scmp.ne.s32.totalorder %s203, %s219
    %p221 = scmp.eq.s32.totalorder %s20, 0
    %p222 = por %p220, %p221
    %p223 = scmp.le.s32.totalorder 1, %s14
    %p224 = scmp.lt.s32.totalorder %s14, 3
    %p225 = pnand %p223, %p224
    %p226 = pneg %p225
    // Predicated region
    $region9: #{attention_gate.1} parent=5 // pred_check
      _
    $region10: #{attention_gate.1} parent=5 // pred_check_branch
      %228 = sbr.rel (%p225) target = $region12
    $region11: #{attention_gate.1} parent=5 // pred_region
      %s229 = ssub.s32 %s14, 1
      // Predicated region
      $region13: #{attention_gate.1} parent=11 // pred_check
        %p230 = pneg %p103
      $region14: #{attention_gate.1} parent=11 // pred_check_branch
        %232 = sbr.rel (%p230) target = $region16
      $region15: #{attention_gate.1} parent=11 // pred_region
        _
      $region16: #{attention_gate.1} parent=11 // pred_fallthru
        _
      // Predicated region
      $region17: #{attention_gate.1} parent=11 // pred_check
        %p233 = pneg %p124
      $region18: #{attention_gate.1} parent=11 // pred_check_branch
        %235 = sbr.rel (%p233) target = $region20
      $region19: #{attention_gate.1} parent=11 // pred_region
        _
      $region20: #{attention_gate.1} parent=11 // pred_fallthru
        _
      // Predicated region
      $region21: #{attention_gate.1} parent=11 // pred_check
        %p236 = pneg %p145
      $region22: #{attention_gate.1} parent=11 // pred_check_branch
        %238 = sbr.rel (%p236) target = $region24
      $region23: #{attention_gate.1} parent=11 // pred_region
        _
      $region24: #{attention_gate.1} parent=11 // pred_fallthru
        _
      // Predicated region
      $region25: #{attention_gate.1} parent=11 // pred_check
        %p239 = pneg %p166
      $region26: #{attention_gate.1} parent=11 // pred_check_branch
        %241 = sbr.rel (%p239) target = $region28
      $region27: #{attention_gate.1} parent=11 // pred_region
        _
      $region28: #{attention_gate.1} parent=11 // pred_fallthru
        _
      // Predicated region
      $region29: #{attention_gate.1} parent=11 // pred_check
        %p242 = pneg %p187
      $region30: #{attention_gate.1} parent=11 // pred_check_branch
        %244 = sbr.rel (%p242) target = $region32
      $region31: #{attention_gate.1} parent=11 // pred_region
        _
      $region32: #{attention_gate.1} parent=11 // pred_fallthru
        _
    $region12: #{attention_gate.1} parent=5 // pred_fallthru
      _
    %p245 = scmp.lt.s32.totalorder %s14, 2
    // Predicated region
    $region33: #{attention_gate.1} parent=5 // pred_check
      %p246 = pneg %p245
    $region34: #{attention_gate.1} parent=5 // pred_check_branch
      %248 = sbr.rel (%p246) target = $region36
    $region35: #{attention_gate.1} parent=5 // pred_region
      // Predicated region
      $region37: #{attention_gate.1} parent=35 // pred_check
        %p249 = pneg %p48
      $region38: #{attention_gate.1} parent=35 // pred_check_branch
        %251 = sbr.rel (%p249) target = $region40
      $region39: #{attention_gate.1} parent=35 // pred_region
        %s252 = smul.u32 2, %s22
        %p253 = scmp.lt.s32.totalorder %s21, 1
        %s254 = scalar_select %p253, %s21, 1
        %p255 = scmp.lt.s32.totalorder %s252, 1
        %s256 = scalar_select %p255, %s252, 1
        %s257 = smul.addr %s254, 2
        %s258 = sadd.s32 %s256, %s257
        %s259 = smul.addr %s258, 8
        %s260 = scalar_lea.vmem %s0, %s259
        %s261 = smul.u32 2, %s22
      $region40: #{attention_gate.1} parent=35 // pred_fallthru
        _
      // Predicated region
      $region41: #{attention_gate.1} parent=35 // pred_check
        %p262 = pneg %p76
      $region42: #{attention_gate.1} parent=35 // pred_check_branch
        %264 = sbr.rel (%p262) target = $region44
      $region43: #{attention_gate.1} parent=35 // pred_region
        %s265 = smul.u32 2, %s22
        %p266 = scmp.lt.s32.totalorder %s21, 1
        %s267 = scalar_select %p266, %s21, 1
        %p268 = scmp.lt.s32.totalorder %s265, 1
        %s269 = scalar_select %p268, %s265, 1
        %s270 = smul.addr %s267, 2
        %s271 = sadd.s32 %s269, %s270
        %s272 = smul.addr %s271, 4
        %s273 = scalar_lea.vmem %s1, %s272
        %s274 = smul.u32 2, %s22
      $region44: #{attention_gate.1} parent=35 // pred_fallthru
        _
    $region36: #{attention_gate.1} parent=5 // pred_fallthru
      _
    %p275 = scmp.le.s32.totalorder 1, %s14
    %p276 = scmp.lt.s32.totalorder %s14, 3
    %p277 = pnand %p275, %p276
    %p278 = pneg %p277
    // Predicated region
    $region45: #{attention_gate.1} parent=5 // pred_check
      _
    $region46: #{attention_gate.1} parent=5 // pred_check_branch
      %280 = sbr.rel (%p277) target = $region48
    $region47: #{attention_gate.1} parent=5 // pred_region
      %s281 = ssub.s32 %s14, 1
      %s282 = smul.u32 2, %s24
      %p283 = scmp.lt.s32.totalorder %s23, 1
      %s284 = scalar_select %p283, %s23, 1
      %p285 = scmp.lt.s32.totalorder %s282, 1
      %s286 = scalar_select %p285, %s282, 1
      %s287 = smul.addr %s284, 2
      %s288 = sadd.s32 %s286, %s287
      %s289 = smul.addr %s288, 8
      %s290 = scalar_lea.vmem %s0, %s289
      %p291 = pneg %p54
      %p292 = pneg %p51
      %s293 = smul.u32 2, %s24
      %p294 = scmp.lt.s32.totalorder %s23, 1
      %s295 = scalar_select %p294, %s23, 1
      %p296 = scmp.lt.s32.totalorder %s293, 1
      %s297 = scalar_select %p296, %s293, 1
      %s298 = smul.addr %s295, 2
      %s299 = sadd.s32 %s297, %s298
      %s300 = smul.addr %s299, 4
      %s301 = scalar_lea.vmem %s1, %s300
      %p302 = pneg %p82
      %p303 = pneg %p79
      %p304 = pneg %p103
      %p305 = pneg %p100
      %p306 = pneg %p124
      %p307 = pneg %p121
      %p308 = pneg %p145
      %p309 = pneg %p142
      %p310 = pneg %p166
      %p311 = pneg %p163
      %p312 = pneg %p187
      %p313 = pneg %p184
      %p314 = pneg %p215
      %p315 = pneg %p212
      %s316 = smul.u32 2, %s24
      %p317 = scmp.lt.s32.totalorder %s23, 1
      %s318 = scalar_select %p317, %s23, 1
      %p319 = scmp.lt.s32.totalorder %s316, 1
      %s320 = scalar_select %p319, %s316, 1
      %s321 = smul.addr %s318, 2
      %s322 = sadd.s32 %s320, %s321
      %s323 = scalar_lea.vmem %s7, %s322
      %s324 = smul.u32 2, %s24
      %p325 = scmp.lt.s32.totalorder %s23, 1
      %s326 = scalar_select %p325, %s23, 1
      %p327 = scmp.lt.s32.totalorder %s324, 1
      %s328 = scalar_select %p327, %s324, 1
      %s329 = smul.addr %s326, 2
      %s330 = sadd.s32 %s328, %s329
      %s331 = smul.addr %s330, 8
      %s332 = scalar_lea.vmem %s0, %s331
      %s333 = smul.u32 2, %s24
      %s334 = smul.u32 2, %s24
      %p335 = scmp.lt.s32.totalorder %s23, 1
      %s336 = scalar_select %p335, %s23, 1
      %p337 = scmp.lt.s32.totalorder %s334, 1
      %s338 = scalar_select %p337, %s334, 1
      %s339 = smul.addr %s336, 2
      %s340 = sadd.s32 %s338, %s339
      %s341 = smul.addr %s340, 4
      %s342 = scalar_lea.vmem %s1, %s341
      %s343 = smul.u32 2, %s24
      %s344 = smul.u32 2, %s24
      %p345 = scmp.lt.s32.totalorder %s23, 1
      %s346 = scalar_select %p345, %s23, 1
      %p347 = scmp.lt.s32.totalorder %s344, 1
      %s348 = scalar_select %p347, %s344, 1
      %s349 = smul.addr %s346, 2
      %s350 = sadd.s32 %s348, %s349
      %s351 = scalar_lea.vmem %s7, %s350
      %s352 = smul.u32 2, %s24
      %v353 = vld [vmem:[%s332] sm:$0x3f]
      %v354 = vld [vmem:[%s332 + $0x8] sm:$0x3f]
      %v355 = vld [vmem:[%s342] sm:$0xff]
      %v356 = vld [vmem:[%s2] sm:$0xff]
      %v357 = vld [vmem:[%s3] sm:$0xff]
      %v359 = vcombine.high %v355, %v355
      %vm360 = vcmask 31744
      %v362 = vsel %vm360, %v357, 0
      %vm364 = vcmask 1043456
      %v365 = vsel %vm364, %v355, 0
      %v367 = vsel %vm364, %v359, 0
      %369 = vmatprep.subr.mxu0 %v367
      %370 = vmatpush1.msra.mxu0 %v365
      %371 = vmatprep.subr.mxu0 0.0
      %372 = vmatpush1.msra.mxu0 0.0
      %373 = vmatprep.subr.mxu0 0.0
      %374 = vmatpush1.msra.mxu0 0.0
      %375 = vmatprep.subr.mxu0 0.0
      %376 = vmatpush1.msra.mxu0 0.0
      %377 = vmatprep.subr.mxu0 0.0
      %378 = vmatpush1.msra.mxu0 0.0
      %379 = vmatprep.subr.mxu0 0.0
      %380 = vmatpush1.msra.mxu0 0.0
      %381 = vmatprep.subr.mxu0 0.0
      %382 = vmatpush1.msra.mxu0 0.0
      %383 = vmatprep.subr.mxu0 0.0
      %384 = vmatpush1.msra.mxu0 0.0
      %385 = vmatprep.subr.mxu0 0.0
      %386 = vmatpush1.msra.mxu0 0.0
      %387 = vmatprep.subr.mxu0 0.0
      %388 = vmatpush1.msra.mxu0 0.0
      %389 = vmatprep.subr.mxu0 0.0
      %390 = vmatpush1.msra.mxu0 0.0
      %391 = vmatprep.subr.mxu0 0.0
      %392 = vmatpush1.msra.mxu0 0.0
      %393 = vmatprep.subr.mxu0 0.0
      %394 = vmatpush1.msra.mxu0 0.0
      %395 = vmatprep.subr.mxu0 0.0
      %396 = vmatpush1.msra.mxu0 0.0
      %397 = vmatprep.subr.mxu0 0.0
      %398 = vmatpush1.msra.mxu0 0.0
      %399 = vmatprep.subr.mxu0 0.0
      %400 = vmatpush1.msra.mxu0 0.0
      %401 = vmatprep.subr.mxu0 0.0
      %402 = vmatpush1.msra.mxu0 0.0
      %403 = vmatprep.subr.mxu0 0.0
      %404 = vmatpush1.msra.mxu0 0.0
      %405 = vmatprep.subr.mxu0 0.0
      %406 = vmatpush1.msra.mxu0 0.0
      %407 = vmatprep.subr.mxu0 0.0
      %408 = vmatpush1.msra.mxu0 0.0
      %409 = vmatprep.subr.mxu0 0.0
      %410 = vmatpush1.msra.mxu0 0.0
      %411 = vmatprep.subr.mxu0 0.0
      %412 = vmatpush1.msra.mxu0 0.0
      %413 = vmatprep.subr.mxu0 0.0
      %414 = vmatpush1.msra.mxu0 0.0
      %415 = vmatprep.subr.mxu0 0.0
      %416 = vmatpush1.msra.mxu0 0.0
      %417 = vmatprep.subr.mxu0 0.0
      %418 = vmatpush1.msra.mxu0 0.0
      %419 = vmatprep.subr.mxu0 0.0
      %420 = vmatpush1.msra.mxu0 0.0
      %421 = vmatprep.subr.mxu0 0.0
      %422 = vmatpush1.msra.mxu0 0.0
      %423 = vmatprep.subr.mxu0 0.0
      %424 = vmatpush1.msra.mxu0 0.0
      %425 = vmatprep.subr.mxu0 0.0
      %426 = vmatpush1.msra.mxu0 0.0
      %427 = vmatprep.subr.mxu0 0.0
      %428 = vmatpush1.msra.mxu0 0.0
      %429 = vmatprep.subr.mxu0 0.0
      %430 = vmatpush1.msra.mxu0 0.0
      %431 = vmatprep.subr.mxu0 0.0
      %432 = vmatpush1.msra.mxu0 0.0
      %433 = vmatprep.mubr.f32.mxu0 0.0
      %434 = vmatmul.mubr.f32.gmra.mrb[0].mxu0 %v362
      %v435 = vpop.f32.mrb[0].mxu0
      %v436 = vadd.f32 0.0, %v435
      %v437 = vpop.f32.mrb[0].mxu0
      %v438 = vadd.f32 0.0, %v437
      %439 = vdwg.mxu0
      %vm440 = vcmask 48128
      %v442 = vsel %vm440, %v356, 0
      %vm444 = vcmask 1045504
      %v446 = vsel %vm444, %v353, 0
      %v449 = vsel %vm444, %v354, 0
      %451 = vmatprep.subr.mxu0 %v449
      %452 = vmatpush1.msra.mxu0 %v446
      %453 = vmatprep.subr.mxu0 0.0
      %454 = vmatpush1.msra.mxu0 0.0
      %455 = vmatprep.subr.mxu0 0.0
      %456 = vmatpush1.msra.mxu0 0.0
      %457 = vmatprep.subr.mxu0 0.0
      %458 = vmatpush1.msra.mxu0 0.0
      %459 = vmatprep.subr.mxu0 0.0
      %460 = vmatpush1.msra.mxu0 0.0
      %461 = vmatprep.subr.mxu0 0.0
      %462 = vmatpush1.msra.mxu0 0.0
      %463 = vmatprep.subr.mxu0 0.0
      %464 = vmatpush1.msra.mxu0 0.0
      %465 = vmatprep.subr.mxu0 0.0
      %466 = vmatpush1.msra.mxu0 0.0
      %467 = vmatprep.subr.mxu0 0.0
      %468 = vmatpush1.msra.mxu0 0.0
      %469 = vmatprep.subr.mxu0 0.0
      %470 = vmatpush1.msra.mxu0 0.0
      %471 = vmatprep.subr.mxu0 0.0
      %472 = vmatpush1.msra.mxu0 0.0
      %473 = vmatprep.subr.mxu0 0.0
      %474 = vmatpush1.msra.mxu0 0.0
      %475 = vmatprep.subr.mxu0 0.0
      %476 = vmatpush1.msra.mxu0 0.0
      %477 = vmatprep.subr.mxu0 0.0
      %478 = vmatpush1.msra.mxu0 0.0
      %479 = vmatprep.subr.mxu0 0.0
      %480 = vmatpush1.msra.mxu0 0.0
      %481 = vmatprep.subr.mxu0 0.0
      %482 = vmatpush1.msra.mxu0 0.0
      %483 = vmatprep.subr.mxu0 0.0
      %484 = vmatpush1.msra.mxu0 0.0
      %485 = vmatprep.subr.mxu0 0.0
      %486 = vmatpush1.msra.mxu0 0.0
      %487 = vmatprep.subr.mxu0 0.0
      %488 = vmatpush1.msra.mxu0 0.0
      %489 = vmatprep.subr.mxu0 0.0
      %490 = vmatpush1.msra.mxu0 0.0
      %491 = vmatprep.subr.mxu0 0.0
      %492 = vmatpush1.msra.mxu0 0.0
      %493 = vmatprep.subr.mxu0 0.0
      %494 = vmatpush1.msra.mxu0 0.0
      %495 = vmatprep.subr.mxu0 0.0
      %496 = vmatpush1.msra.mxu0 0.0
      %497 = vmatprep.subr.mxu0 0.0
      %498 = vmatpush1.msra.mxu0 0.0
      %499 = vmatprep.subr.mxu0 0.0
      %500 = vmatpush1.msra.mxu0 0.0
      %501 = vmatprep.subr.mxu0 0.0
      %502 = vmatpush1.msra.mxu0 0.0
      %503 = vmatprep.subr.mxu0 0.0
      %504 = vmatpush1.msra.mxu0 0.0
      %505 = vmatprep.subr.mxu0 0.0
      %506 = vmatpush1.msra.mxu0 0.0
      %507 = vmatprep.subr.mxu0 0.0
      %508 = vmatpush1.msra.mxu0 0.0
      %509 = vmatprep.subr.mxu0 0.0
      %510 = vmatpush1.msra.mxu0 0.0
      %511 = vmatprep.subr.mxu0 0.0
      %512 = vmatpush1.msra.mxu0 0.0
      %513 = vmatprep.subr.mxu0 0.0
      %514 = vmatpush1.msra.mxu0 0.0
      %515 = vmatprep.mubr.f32.mxu0 0.0
      %516 = vmatmul.mubr.f32.gmra.mrb[0].mxu0 %v442
      %v517 = vpop.f32.mrb[0].mxu0
      %v518 = vadd.f32 %v436, %v517
      %v519 = vpop.f32.mrb[0].mxu0
      %v520 = vadd.f32 %v438, %v519
      %521 = vdwg.mxu0
      %v522 = vld [vmem:[%s5] sm:$0xff]
      %524 = vset.pattern.permute.xlu0 0
      %525 = vperm.xlu0 %524, %v522
      %v526 = vpop.permute.xlu0 %525
      %v528 = vadd.f32 %v518, %v526
      %v529 = vadd.f32 %v520, %v526
      %v530 = vmax.f32 %v528, 0.0
      %v531 = vmax.f32 %v529, 0.0
      %v532 = vld [vmem:[%s4] sm:$0x1]
      %s533 = sld [smem:[#allocation2]]
      %v534 = vstv %s533
      %vm535 = vcmask 64512
      %v537 = vsel %vm535, %v532, 0
      %539 = vmatprep.subr.mxu0 %v531
      %540 = vmatpush1.msra.mxu0 %v530
      %541 = vmatprep.subr.mxu0 0.0
      %542 = vmatpush1.msra.mxu0 0.0
      %543 = vmatprep.subr.mxu0 0.0
      %544 = vmatpush1.msra.mxu0 0.0
      %545 = vmatprep.subr.mxu0 0.0
      %546 = vmatpush1.msra.mxu0 0.0
      %547 = vmatprep.subr.mxu0 0.0
      %548 = vmatpush1.msra.mxu0 0.0
      %549 = vmatprep.subr.mxu0 0.0
      %550 = vmatpush1.msra.mxu0 0.0
      %551 = vmatprep.subr.mxu0 0.0
      %552 = vmatpush1.msra.mxu0 0.0
      %553 = vmatprep.subr.mxu0 0.0
      %554 = vmatpush1.msra.mxu0 0.0
      %555 = vmatprep.subr.mxu0 0.0
      %556 = vmatpush1.msra.mxu0 0.0
      %557 = vmatprep.subr.mxu0 0.0
      %558 = vmatpush1.msra.mxu0 0.0
      %559 = vmatprep.subr.mxu0 0.0
      %560 = vmatpush1.msra.mxu0 0.0
      %561 = vmatprep.subr.mxu0 0.0
      %562 = vmatpush1.msra.mxu0 0.0
      %563 = vmatprep.subr.mxu0 0.0
      %564 = vmatpush1.msra.mxu0 0.0
      %565 = vmatprep.subr.mxu0 0.0
      %566 = vmatpush1.msra.mxu0 0.0
      %567 = vmatprep.subr.mxu0 0.0
      %568 = vmatpush1.msra.mxu0 0.0
      %569 = vmatprep.subr.mxu0 0.0
      %570 = vmatpush1.msra.mxu0 0.0
      %571 = vmatprep.subr.mxu0 0.0
      %572 = vmatpush1.msra.mxu0 0.0
      %573 = vmatprep.subr.mxu0 0.0
      %574 = vmatpush1.msra.mxu0 0.0
      %575 = vmatprep.subr.mxu0 0.0
      %576 = vmatpush1.msra.mxu0 0.0
      %577 = vmatprep.subr.mxu0 0.0
      %578 = vmatpush1.msra.mxu0 0.0
      %579 = vmatprep.subr.mxu0 0.0
      %580 = vmatpush1.msra.mxu0 0.0
      %581 = vmatprep.subr.mxu0 0.0
      %582 = vmatpush1.msra.mxu0 0.0
      %583 = vmatprep.subr.mxu0 0.0
      %584 = vmatpush1.msra.mxu0 0.0
      %585 = vmatprep.subr.mxu0 0.0
      %586 = vmatpush1.msra.mxu0 0.0
      %587 = vmatprep.subr.mxu0 0.0
      %588 = vmatpush1.msra.mxu0 0.0
      %589 = vmatprep.subr.mxu0 0.0
      %590 = vmatpush1.msra.mxu0 0.0
      %591 = vmatprep.subr.mxu0 0.0
      %592 = vmatpush1.msra.mxu0 0.0
      %593 = vmatprep.subr.mxu0 0.0
      %594 = vmatpush1.msra.mxu0 0.0
      %595 = vmatprep.subr.mxu0 0.0
      %596 = vmatpush1.msra.mxu0 0.0
      %597 = vmatprep.subr.mxu0 0.0
      %598 = vmatpush1.msra.mxu0 0.0
      %599 = vmatprep.subr.mxu0 0.0
      %600 = vmatpush1.msra.mxu0 0.0
      %601 = vmatprep.subr.mxu0 0.0
      %602 = vmatpush1.msra.mxu0 0.0
      %603 = vmatprep.mubr.f32.mxu0 0.0
      %604 = vmatmul.mubr.f32.gmra.mrb[0].mxu0 %v537
      %v605 = vpop.f32.mrb[0].mxu0
      %v606 = vadd.f32 %v534, %v605
      %v607 = vpop.f32.mrb[0].mxu0
      %v608 = vadd.f32 %v534, %v607
      %609 = vdwg.mxu0
      %v610 = vxor.u32 %v606, 2147483648
      %v611 = vxor.u32 %v608, 2147483648
      %v612 = vmul.f32 %v610, 1.442695
      %v613 = vpow.pop %v612
      %v614 = vmul.f32 %v611, 1.442695
      %v615 = vpow.pop %v614
      %v616 = vadd.f32 %v613, 1.0
      %v617 = vadd.f32 %v615, 1.0
      %v618 = vrcp.pop %v616
      %v619 = vmul.f32 1.0, %v618
      %v620 = vrcp.pop %v617
      %v621 = vmul.f32 1.0, %v620
      %v624 = vcombine.low %v619, %v621
      %v626 = vunpack.c.l.s4 1966171168
      %v627 = vunpack.c.0.s8 %v626
      %v628 = vlaneseq
      %v629 = vshrl.u32 %v628, 7
      %v630 = vsub.s32 %v627, %v629
      %v631 = vrot.slane %v624, %v630
      %v633 = vunpack.c.l.s4 1966171168
      %v634 = vunpack.c.0.s8 %v633
      %v635 = vlaneseq
      %v636 = vshrl.u32 %v635, 7
      %v637 = vsub.s32 %v634, %v636
      %v638 = vrot.slane %v631, %v637
      %v640 = vlaneseq
      %vm641 = vcmp.ge.s32.totalorder %v640, 0
      %vm642 = vcmp.lt.s32.totalorder %v640, 256
      %vm643 = vmand %vm641, %vm642
      %644 = vst.msk [vmem:[%s351] sm:$0x3] %vm643, %v638
      %s645 = smul.u32 2, %s24
      %p646 = scmp.lt.s32.totalorder %s23, 1
      %s647 = scalar_select %p646, %s23, 1
      %p648 = scmp.lt.s32.totalorder %s645, 1
      %s649 = scalar_select %p648, %s645, 1
      %s650 = smul.addr %s647, 2
      %s651 = sadd.s32 %s649, %s650
      %s652 = scalar_lea.vmem %s7, %s651
      // Predicated region
      $region49: #{attention_gate.1} parent=47 // pred_check
        %p653 = pneg %p212
      $region50: #{attention_gate.1} parent=47 // pred_check_branch
        %655 = sbr.rel (%p653) target = $region52
      $region51: #{attention_gate.1} parent=47 // pred_region
        %s656 = smul.u32 2, %s24
      $region52: #{attention_gate.1} parent=47 // pred_fallthru
        _
    $region48: #{attention_gate.1} parent=5 // pred_fallthru
      _
    %p657 = scmp.le.s32.totalorder 2, %s14
    // Predicated region
    $region53: #{attention_gate.1} parent=5 // pred_check
      %p658 = pneg %p657
    $region54: #{attention_gate.1} parent=5 // pred_check_branch
      %660 = sbr.rel (%p658) target = $region56
    $region55: #{attention_gate.1} parent=5 // pred_region
      %s661 = ssub.s32 %s14, 2
      // Predicated region
      $region57: #{attention_gate.1} parent=55 // pred_check
        %p662 = pneg %p218
      $region58: #{attention_gate.1} parent=55 // pred_check_branch
        %664 = sbr.rel (%p662) target = $region60
      $region59: #{attention_gate.1} parent=55 // pred_region
        %s665 = smul.u32 2, %s26
        %p666 = scmp.lt.s32.totalorder %s25, 1
        %s667 = scalar_select %p666, %s25, 1
        %p668 = scmp.lt.s32.totalorder %s665, 1
        %s669 = scalar_select %p668, %s665, 1
        %s670 = smul.addr %s667, 2
        %s671 = sadd.s32 %s669, %s670
        %s672 = scalar_lea.vmem %s7, %s671
      $region60: #{attention_gate.1} parent=55 // pred_fallthru
        _
    $region56: #{attention_gate.1} parent=5 // pred_fallthru
      _
  $region6: #{attention_gate.1} parent=0 // loop_footer
    %s18 = sadd.s32 1, %s14
  $region7: #{attention_gate.1} parent=0 // loop_footer_branch
    %13 = sbr.rel target = $region3
  $region8: #{attention_gate.1} parent=0 // loop_exit
    _

</llo_original>
